<compile_context>
chip_gen: v7x
topology: tpu7x:2x2x1
jax: 0.10.0
libtpu: 0.0.40
codegen_flags: <defaults>
</compile_context>

<pallas_src>
import jax
import jax.numpy as jnp
from jax.experimental import pallas as pl
from jax.experimental.pallas import tpu as pltpu


def _cdiv(a, b):
    return -(-a // b)


def _round_up(a, b):
    return _cdiv(a, b) * b


def _tensorcores_per_chip():
    """Best-effort TensorCore count for megacore grid balancing (v7x == 2)."""
    try:
        kind = jax.devices()[0].device_kind.lower()
    except Exception:
        return 1
    return 2 if "v7" in kind else 1


def _mlp_kernel(x_ref, w1_ref, b1_ref, w2_ref, b2_ref, w3_ref, b3_ref, o_ref):
    # bf16 MXU operands, f32 accumulation via preferred_element_type.
    x = x_ref[...].astype(jnp.bfloat16)

    # Layer 1: Linear + ReLU   (packed: (bm_p, p*in) @ (p*in, p*hid))
    h = jnp.dot(x, w1_ref[...], preferred_element_type=jnp.float32) + b1_ref[...]
    h = jnp.maximum(h, 0.0)

    # Layer 2: Linear + ReLU
    h = jnp.dot(h.astype(jnp.bfloat16), w2_ref[...],
                preferred_element_type=jnp.float32) + b2_ref[...]
    h = jnp.maximum(h, 0.0)

    # Layer 3: Linear + Sigmoid
    h = jnp.dot(h.astype(jnp.bfloat16), w3_ref[...],
                preferred_element_type=jnp.float32) + b3_ref[...]
    # sigmoid = 1/(1+exp(-h)); exp and the seed reciprocal run on the EUP slot,
    # one Newton step (cheap VALU, free under DMA slack) restores ~f32 accuracy.
    d = 1.0 + jnp.exp(-h)
    r = pl.reciprocal(d, approx=True)
    r = r * (2.0 - d * r)

    o_ref[...] = r.astype(o_ref.dtype)


def appearance_align_net_forward(x, params, *, block_rows=32768):
    """Forward pass of appearance_align_net.

    x: (N, in_dim); params: dict with W1 (in,h), b1 (h,), W2 (h,h), b2 (h,),
    W3 (h,in), b3 (in,).  Returns (N, in_dim) in x.dtype.
    """
    n, in_dim = x.shape
    out_dtype = x.dtype

    # Lane-packing factor: fold p consecutive rows into one 128-wide packed row.
    p = 128 // in_dim if (0 < in_dim <= 128 and 128 % in_dim == 0) else 1

    # Zero-copy padding: pad only up to a multiple of p (needed so the packed
    # reshape is a pure row-major relabeling).  No-op whenever p divides n.
    n_pack = _round_up(n, p)
    xw = x
    if n_pack != n:
        xw = jnp.pad(xw, ((0, n_pack - n), (0, 0)))
    rows = n_pack // p                        # packed rows
    lanes = p * in_dim                        # packed row width (128 when packed)
    xp = xw.reshape(rows, lanes)              # row-major: free relabeling

    # ---- batch tile (packed rows per grid step) ----
    bm_p = max(8, (int(block_rows) // p) // 8 * 8)
    bm_p = min(bm_p, _round_up(rows, 8))
    # Megacore (v7x): make the grid an even number (>= 2) of balanced steps.
    if _tensorcores_per_chip() >= 2:
        steps = _cdiv(rows, bm_p)
        if steps % 2 == 1 and rows > 8:
            bm_even = _round_up(_cdiv(rows, steps + 1), 8)
            if _cdiv(rows, bm_even) % 2 == 0:
                bm_p = bm_even
    grid = (_cdiv(rows, bm_p),)               # trailing block may be partial

    # ---- bf16 block-diagonal weights (p copies of W on the diagonal) ----
    eye = jnp.eye(p, dtype=jnp.float32)

    def block_diag(w):                         # (a, b) -> bf16 (p*a, p*b)
        return jnp.kron(eye, w.astype(jnp.float32)).astype(jnp.bfloat16)

    def tile_bias(b):                          # (c,) -> f32 (1, p*c)
        return jnp.tile(b.astype(jnp.float32), p).reshape(1, -1)

    w1, b1 = block_diag(params["W1"]), tile_bias(params["b1"])
    w2, b2 = block_diag(params["W2"]), tile_bias(params["b2"])
    w3, b3 = block_diag(params["W3"]), tile_bias(params["b3"])

    # Grid-invariant weights/biases: constant index_map -> fetched once.
    full = lambda arr: pl.BlockSpec(arr.shape, lambda i: (0, 0))

    out_p = pl.pallas_call(
        _mlp_kernel,
        out_shape=jax.ShapeDtypeStruct((rows, lanes), out_dtype),
        grid_spec=pltpu.PrefetchScalarGridSpec(
            num_scalar_prefetch=0,
            grid=grid,
            in_specs=[
                pl.BlockSpec((bm_p, lanes), lambda i: (i, 0)),   # x tile
                full(w1), full(b1),     # layer 1 (loaded once, stays in VMEM)
                full(w2), full(b2),     # layer 2
                full(w3), full(b3),     # layer 3
            ],
            out_specs=pl.BlockSpec((bm_p, lanes), lambda i: (i, 0)),
        ),
        compiler_params=pltpu.CompilerParams(
            dimension_semantics=("parallel",),
            # ~17-20 MiB peak at the default tile; 48 MiB leaves headroom while
            # staying safely under v7x's 64 MiB physical VMEM.
            vmem_limit_bytes=48 * 1024 * 1024,
        ),
    )(xp, w1, b1, w2, b2, w3, b3)

    out = out_p.reshape(n_pack, in_dim)
    if n_pack != n:
        out = out[:n]
    return out.astype(out_dtype)


def init_params(key, in_dim, hidden_dim):
    """Deterministic init mimicking torch.nn.Linear (uniform +/- 1/sqrt(fan_in))."""
    ks = jax.random.split(key, 6)

    def linear(kw, kb, fan_in, fan_out):
        bound = 1.0 / jnp.sqrt(fan_in)
        w = jax.random.uniform(kw, (fan_in, fan_out), jnp.float32, -bound, bound)
        b = jax.random.uniform(kb, (fan_out,), jnp.float32, -bound, bound)
        return w, b

    w1, b1 = linear(ks[0], ks[1], in_dim, hidden_dim)
    w2, b2 = linear(ks[2], ks[3], hidden_dim, hidden_dim)
    w3, b3 = linear(ks[4], ks[5], hidden_dim, in_dim)
    return {"W1": w1, "b1": b1, "W2": w2, "b2": b2, "W3": w3, "b3": b3}


def reference_forward(x, p):
    h = jnp.maximum(x @ p["W1"] + p["b1"], 0.0)
    h = jnp.maximum(h @ p["W2"] + p["b2"], 0.0)
    return jax.nn.sigmoid(h @ p["W3"] + p["b3"])


if __name__ == "__main__":
    key = jax.random.PRNGKey(0)
    k_x, k_p = jax.random.split(key)

    in_dim = 16      # appearance-code embedding dim
    hidden_dim = 32  # MLP layer width (module default)
    batch = 1000     # multiple of p=8 (zero-copy path) but not of the tile:
                     # exercises the partial trailing block + megacore split

    x = jax.random.normal(k_x, (batch, in_dim), dtype=jnp.float32)
    params = init_params(k_p, in_dim, hidden_dim)

    out = appearance_align_net_forward(x, params)
    out = jax.block_until_ready(out)

    ref = reference_forward(x, params)
    assert out.shape == (batch, in_dim)
    # bf16 MXU operands (weights + activations) quantize the logits by ~1e-2
    # worst case; the sigmoid compresses that to a few e-3 at the output.
    assert jnp.allclose(out, ref, atol=2e-2, rtol=2e-2), "mismatch vs JAX reference"

    print("KERNEL_OK")
</pallas_src>

<mosaic_0001>
module attributes {stable_mosaic.version = 11 : i64} {
  func.func @_mlp_kernel(%arg0: i32, %arg1: memref<128x128xf32, #tpu.memory_space<vmem>>, %arg2: memref<128x256xbf16, #tpu.memory_space<vmem>>, %arg3: memref<1x256xf32, #tpu.memory_space<vmem>>, %arg4: memref<256x256xbf16, #tpu.memory_space<vmem>>, %arg5: memref<1x256xf32, #tpu.memory_space<vmem>>, %arg6: memref<256x128xbf16, #tpu.memory_space<vmem>>, %arg7: memref<1x128xf32, #tpu.memory_space<vmem>>, %arg8: memref<128x128xf32, #tpu.memory_space<vmem>>) attributes {dimension_semantics = [#tpu.dimension_semantics<parallel>], iteration_bounds = array<i64: 1>, scalar_prefetch = 0 : i64, scratch_operands = 0 : i64, tpu.core_type = #tpu.core_type<tc>, window_params = [{transform_indices = @transform_0, window_bounds = array<i64: 128, 128>}, {pipeline_mode = #tpu.pipeline_mode<synchronous>, transform_indices = @transform_1, window_bounds = array<i64: 128, 256>}, {pipeline_mode = #tpu.pipeline_mode<synchronous>, transform_indices = @transform_2, window_bounds = array<i64: 1, 256>}, {pipeline_mode = #tpu.pipeline_mode<synchronous>, transform_indices = @transform_3, window_bounds = array<i64: 256, 256>}, {pipeline_mode = #tpu.pipeline_mode<synchronous>, transform_indices = @transform_4, window_bounds = array<i64: 1, 256>}, {pipeline_mode = #tpu.pipeline_mode<synchronous>, transform_indices = @transform_5, window_bounds = array<i64: 256, 128>}, {pipeline_mode = #tpu.pipeline_mode<synchronous>, transform_indices = @transform_6, window_bounds = array<i64: 1, 128>}, {transform_indices = @transform_7, window_bounds = array<i64: 128, 128>}]} {
    %c0 = arith.constant 0 : index
    %c0_0 = arith.constant 0 : index
    %0 = vector.load %arg1[%c0, %c0_0] : memref<128x128xf32, #tpu.memory_space<vmem>>, vector<128x128xf32>
    %1 = arith.truncf %0 : vector<128x128xf32> to vector<128x128xbf16>
    %c0_1 = arith.constant 0 : index
    %c0_2 = arith.constant 0 : index
    %2 = vector.load %arg2[%c0_1, %c0_2] : memref<128x256xbf16, #tpu.memory_space<vmem>>, vector<128x256xbf16>
    %cst = arith.constant dense<0.000000e+00> : vector<128x256xf32>
    %3 = tpu.matmul %1, %2, %cst {dimension_numbers = #tpu.dot_dimension_numbers<[1], [0], [0], [1], [0, 0, 1, 1], [], []>} : vector<128x128xbf16>, vector<128x256xbf16>, vector<128x256xf32> -> vector<128x256xf32>
    %c0_3 = arith.constant 0 : index
    %c0_4 = arith.constant 0 : index
    %4 = vector.load %arg3[%c0_3, %c0_4] : memref<1x256xf32, #tpu.memory_space<vmem>>, vector<1x256xf32>
    %5 = vector.broadcast %4 : vector<1x256xf32> to vector<128x256xf32>
    %6 = arith.addf %3, %5 : vector<128x256xf32>
    %cst_5 = arith.constant 0.000000e+00 : f32
    %7 = vector.broadcast %cst_5 : f32 to vector<128x256xf32>
    %8 = arith.maximumf %6, %7 : vector<128x256xf32>
    %9 = arith.truncf %8 : vector<128x256xf32> to vector<128x256xbf16>
    %c0_6 = arith.constant 0 : index
    %c0_7 = arith.constant 0 : index
    %10 = vector.load %arg4[%c0_6, %c0_7] : memref<256x256xbf16, #tpu.memory_space<vmem>>, vector<256x256xbf16>
    %cst_8 = arith.constant dense<0.000000e+00> : vector<128x256xf32>
    %11 = tpu.matmul %9, %10, %cst_8 {dimension_numbers = #tpu.dot_dimension_numbers<[1], [0], [0], [1], [0, 0, 1, 1], [], []>} : vector<128x256xbf16>, vector<256x256xbf16>, vector<128x256xf32> -> vector<128x256xf32>
    %c0_9 = arith.constant 0 : index
    %c0_10 = arith.constant 0 : index
    %12 = vector.load %arg5[%c0_9, %c0_10] : memref<1x256xf32, #tpu.memory_space<vmem>>, vector<1x256xf32>
    %13 = vector.broadcast %12 : vector<1x256xf32> to vector<128x256xf32>
    %14 = arith.addf %11, %13 : vector<128x256xf32>
    %cst_11 = arith.constant 0.000000e+00 : f32
    %15 = vector.broadcast %cst_11 : f32 to vector<128x256xf32>
    %16 = arith.maximumf %14, %15 : vector<128x256xf32>
    %17 = arith.truncf %16 : vector<128x256xf32> to vector<128x256xbf16>
    %c0_12 = arith.constant 0 : index
    %c0_13 = arith.constant 0 : index
    %18 = vector.load %arg6[%c0_12, %c0_13] : memref<256x128xbf16, #tpu.memory_space<vmem>>, vector<256x128xbf16>
    %cst_14 = arith.constant dense<0.000000e+00> : vector<128x128xf32>
    %19 = tpu.matmul %17, %18, %cst_14 {dimension_numbers = #tpu.dot_dimension_numbers<[1], [0], [0], [1], [0, 0, 1, 1], [], []>} : vector<128x256xbf16>, vector<256x128xbf16>, vector<128x128xf32> -> vector<128x128xf32>
    %c0_15 = arith.constant 0 : index
    %c0_16 = arith.constant 0 : index
    %20 = vector.load %arg7[%c0_15, %c0_16] : memref<1x128xf32, #tpu.memory_space<vmem>>, vector<1x128xf32>
    %21 = vector.broadcast %20 : vector<1x128xf32> to vector<128x128xf32>
    %22 = arith.addf %19, %21 : vector<128x128xf32>
    %cst_17 = arith.constant 0.000000e+00 : f32
    %23 = vector.broadcast %cst_17 : f32 to vector<128x128xf32>
    %24 = arith.subf %23, %22 : vector<128x128xf32>
    %25 = math.exp %24 : vector<128x128xf32>
    %cst_18 = arith.constant 1.000000e+00 : f32
    %26 = vector.broadcast %cst_18 : f32 to vector<128x128xf32>
    %27 = arith.addf %26, %25 : vector<128x128xf32>
    %28 = tpu.reciprocal %27 {approx = true} : vector<128x128xf32> -> vector<128x128xf32>
    %29 = arith.mulf %27, %28 : vector<128x128xf32>
    %cst_19 = arith.constant 2.000000e+00 : f32
    %30 = vector.broadcast %cst_19 : f32 to vector<128x128xf32>
    %31 = arith.subf %30, %29 : vector<128x128xf32>
    %32 = arith.mulf %28, %31 : vector<128x128xf32>
    %c0_20 = arith.constant 0 : index
    %c0_21 = arith.constant 0 : index
    %33 = vector.load %arg8[%c0_20, %c0_21] : memref<128x128xf32, #tpu.memory_space<vmem>>, vector<128x128xf32>
    tpu.vector_store %arg8[%c0_20, %c0_21], %32 {strides = array<i32>} : memref<128x128xf32, #tpu.memory_space<vmem>>, vector<128x128xf32>,
    return
  }
  func.func @transform_0(%arg0: i32) -> (i32, i32) {
    %c0_i32 = arith.constant 0 : i32
    %c0_i32_0 = arith.constant 0 : i32
    return %arg0, %c0_i32 : i32, i32
  }
  func.func @transform_1(%arg0: i32) -> (i32, i32) {
    %c0_i32 = arith.constant 0 : i32
    %c0_i32_0 = arith.constant 0 : i32
    %c0_i32_1 = arith.constant 0 : i32
    return %c0_i32, %c0_i32_0 : i32, i32
  }
  func.func @transform_2(%arg0: i32) -> (i32, i32) {
    %c0_i32 = arith.constant 0 : i32
    %c0_i32_0 = arith.constant 0 : i32
    %c0_i32_1 = arith.constant 0 : i32
    return %c0_i32, %c0_i32_0 : i32, i32
  }
  func.func @transform_3(%arg0: i32) -> (i32, i32) {
    %c0_i32 = arith.constant 0 : i32
    %c0_i32_0 = arith.constant 0 : i32
    %c0_i32_1 = arith.constant 0 : i32
    return %c0_i32, %c0_i32_0 : i32, i32
  }
  func.func @transform_4(%arg0: i32) -> (i32, i32) {
    %c0_i32 = arith.constant 0 : i32
    %c0_i32_0 = arith.constant 0 : i32
    %c0_i32_1 = arith.constant 0 : i32
    return %c0_i32, %c0_i32_0 : i32, i32
  }
  func.func @transform_5(%arg0: i32) -> (i32, i32) {
    %c0_i32 = arith.constant 0 : i32
    %c0_i32_0 = arith.constant 0 : i32
    %c0_i32_1 = arith.constant 0 : i32
    return %c0_i32, %c0_i32_0 : i32, i32
  }
  func.func @transform_6(%arg0: i32) -> (i32, i32) {
    %c0_i32 = arith.constant 0 : i32
    %c0_i32_0 = arith.constant 0 : i32
    %c0_i32_1 = arith.constant 0 : i32
    return %c0_i32, %c0_i32_0 : i32, i32
  }
  func.func @transform_7(%arg0: i32) -> (i32, i32) {
    %c0_i32 = arith.constant 0 : i32
    %c0_i32_0 = arith.constant 0 : i32
    return %arg0, %c0_i32 : i32, i32
  }
}

</mosaic_0001>

<llo_original>
// kernel: tpu_custom_call.1
$region0: #{tpu_custom_call.1}
  #allocation0 [shape = 'u32[]', space=smem, size = 0x4, offset = 0x4, fixed_abs, tag = 'smem constant byte address 0x4 - core index']
  #allocation1 [shape = 'u32[144,128]{1,0:T(1,128)}', space=vmem, size = 0x12000, scoped, tag = 'internal scratch']
  %s0 = inlined_call_operand.hbm [shape: f32[125,128], index: 0, kind: input, shape index: {}]
  %s1 = inlined_call_operand.hbm [shape: bf16[128,256], index: 1, kind: input, shape index: {}]
  %s2 = inlined_call_operand.vmem [shape: f32[1,256], index: 2, kind: input, shape index: {}]
  %s3 = inlined_call_operand.hbm [shape: bf16[256,256], index: 3, kind: input, shape index: {}]
  %s4 = inlined_call_operand.vmem [shape: f32[1,256], index: 4, kind: input, shape index: {}]
  %s5 = inlined_call_operand.hbm [shape: bf16[256,128], index: 5, kind: input, shape index: {}]
  %s6 = inlined_call_operand.vmem [shape: f32[1,128], index: 6, kind: input, shape index: {}]
  %s7 = inlined_call_operand.hbm [shape: f32[125,128], index: 7, kind: output, shape index: {}]
  %s8 = sld [smem:[#allocation0]]
  $region54: #{tpu_custom_call.1} parent=0
    _
  %s10 = ssub.s32 1, %s8
  %s11 = scalar_select 0, %s10, %s8
  $region1: #{tpu_custom_call.1} parent=0
    #allocation2 [shape = 'u8[65536]{0}', space=vmem, size = 0x10000, scoped, tag = 'input window, operand 0, single buffered']
    #allocation3 [shape = 's32[1]{0}', space=sflag, size = 0x4, scoped, tag = 'scoped memory for tpu_custom_call.1']
    #allocation4 [shape = 's32[1]{0}', space=sflag, size = 0x4, scoped, tag = 'scoped memory for tpu_custom_call.1']
    #allocation5 [shape = 'u8[65536]{0}', space=vmem, size = 0x10000, scoped, tag = 'input window, operand 1, single buffered']
    #allocation6 [shape = 's32[1]{0}', space=sflag, size = 0x4, scoped, tag = 'scoped memory for tpu_custom_call.1']
    #allocation7 [shape = 'u8[131072]{0}', space=vmem, size = 0x20000, scoped, tag = 'input window, operand 3, single buffered']
    #allocation8 [shape = 'u8[65536]{0}', space=vmem, size = 0x10000, scoped, tag = 'input window, operand 5, single buffered']
    #allocation9 [shape = 's32[1]{0}', space=sflag, size = 0x4, scoped, tag = 'scoped memory for tpu_custom_call.1']
    #allocation10 [shape = 'u8[65536]{0}', space=vmem, size = 0x10000, scoped, tag = 'output window, operand 0, single buffered']
    %12 = vsyncpa [#allocation3], 0
    %13 = vsyncpa [#allocation6], 0
    %14 = vsyncpa [#allocation9], 0
    %15 = vsyncpa [#allocation4], 0
    // Predicated region
    $region2: #{tpu_custom_call.1} parent=1 // pred_check
      _
    $region3: #{tpu_custom_call.1} parent=1 // pred_check_branch
      %17 = sbr.rel (0) target = $region5
    $region4: #{tpu_custom_call.1} parent=1 // pred_region
      %s19 = ssub.s32 2048, 2048
      %20 = vsyncadd [#allocation3], %s19
      %s21 = sshll.u32 [#allocation2], 4
      %s22 = int_to_ptr.vmem [resolvable:$true] %s21
      %27 = dma.hbm_to_vmem [thread:$0]  %s0, 2048, %s22, [#allocation3], 128, 128, 8
    $region5: #{tpu_custom_call.1} parent=1 // pred_fallthru
      _
    // Predicated region
    $region6: #{tpu_custom_call.1} parent=1 // pred_check
      _
    $region7: #{tpu_custom_call.1} parent=1 // pred_check_branch
      %29 = sbr.rel (0) target = $region9
    $region8: #{tpu_custom_call.1} parent=1 // pred_region
      %s31 = ssub.s32 2048, 2048
      %32 = vsyncadd [#allocation6], %s31
      %s33 = sshll.u32 [#allocation5], 4
      %s34 = int_to_ptr.vmem [resolvable:$true] %s33
      %39 = dma.hbm_to_vmem [thread:$0]  %s1, 2048, %s34, [#allocation6], 128, 128, 8
    $region9: #{tpu_custom_call.1} parent=1 // pred_fallthru
      _
    // Predicated region
    $region10: #{tpu_custom_call.1} parent=1 // pred_check
      _
    $region11: #{tpu_custom_call.1} parent=1 // pred_check_branch
      %41 = sbr.rel (0) target = $region13
    $region12: #{tpu_custom_call.1} parent=1 // pred_region
      _
    $region13: #{tpu_custom_call.1} parent=1 // pred_fallthru
      _
    // Predicated region
    $region14: #{tpu_custom_call.1} parent=1 // pred_check
      _
    $region15: #{tpu_custom_call.1} parent=1 // pred_check_branch
      %43 = sbr.rel (0) target = $region17
    $region16: #{tpu_custom_call.1} parent=1 // pred_region
      %s45 = ssub.s32 4096, 4096
      %46 = vsyncadd [#allocation6], %s45
      %s47 = sshll.u32 [#allocation7], 4
      %s48 = int_to_ptr.vmem [resolvable:$true] %s47
      %53 = dma.hbm_to_vmem [thread:$0]  %s3, 4096, %s48, [#allocation6], 128, 128, 8
    $region17: #{tpu_custom_call.1} parent=1 // pred_fallthru
      _
    // Predicated region
    $region18: #{tpu_custom_call.1} parent=1 // pred_check
      _
    $region19: #{tpu_custom_call.1} parent=1 // pred_check_branch
      %55 = sbr.rel (0) target = $region21
    $region20: #{tpu_custom_call.1} parent=1 // pred_region
      _
    $region21: #{tpu_custom_call.1} parent=1 // pred_fallthru
      _
    // Predicated region
    $region22: #{tpu_custom_call.1} parent=1 // pred_check
      _
    $region23: #{tpu_custom_call.1} parent=1 // pred_check_branch
      %57 = sbr.rel (0) target = $region25
    $region24: #{tpu_custom_call.1} parent=1 // pred_region
      %s59 = ssub.s32 2048, 2048
      %60 = vsyncadd [#allocation9], %s59
      %s61 = sshll.u32 [#allocation8], 4
      %s62 = int_to_ptr.vmem [resolvable:$true] %s61
      %67 = dma.hbm_to_vmem [thread:$0]  %s5, 2048, %s62, [#allocation9], 64, 64, 4
    $region25: #{tpu_custom_call.1} parent=1 // pred_fallthru
      _
    // Predicated region
    $region26: #{tpu_custom_call.1} parent=1 // pred_check
      _
    $region27: #{tpu_custom_call.1} parent=1 // pred_check_branch
      %69 = sbr.rel (0) target = $region29
    $region28: #{tpu_custom_call.1} parent=1 // pred_region
      _
    $region29: #{tpu_custom_call.1} parent=1 // pred_fallthru
      _
    // Predicated region
    $region30: #{tpu_custom_call.1} parent=1 // pred_check
      _
    $region31: #{tpu_custom_call.1} parent=1 // pred_check_branch
      %71 = sbr.rel (0) target = $region33
    $region32: #{tpu_custom_call.1} parent=1 // pred_region
      %72 = dma.done [#allocation3], 2048
    $region33: #{tpu_custom_call.1} parent=1 // pred_fallthru
      _
    // Predicated region
    $region34: #{tpu_custom_call.1} parent=1 // pred_check
      _
    $region35: #{tpu_custom_call.1} parent=1 // pred_check_branch
      %74 = sbr.rel (0) target = $region37
    $region36: #{tpu_custom_call.1} parent=1 // pred_region
      %75 = dma.done [#allocation6], 2048
    $region37: #{tpu_custom_call.1} parent=1 // pred_fallthru
      _
    // Predicated region
    $region38: #{tpu_custom_call.1} parent=1 // pred_check
      _
    $region39: #{tpu_custom_call.1} parent=1 // pred_check_branch
      %77 = sbr.rel (0) target = $region41
    $region40: #{tpu_custom_call.1} parent=1 // pred_region
      %78 = dma.done [#allocation6], 4096
    $region41: #{tpu_custom_call.1} parent=1 // pred_fallthru
      _
    // Predicated region
    $region42: #{tpu_custom_call.1} parent=1 // pred_check
      _
    $region43: #{tpu_custom_call.1} parent=1 // pred_check_branch
      %80 = sbr.rel (0) target = $region45
    $region44: #{tpu_custom_call.1} parent=1 // pred_region
      %81 = dma.done [#allocation9], 2048
    $region45: #{tpu_custom_call.1} parent=1 // pred_fallthru
      _
    %v83 = vld [vmem:[#allocation2] sm:$0xff]
    %v84 = vld [vmem:[#allocation2 + $0x8] sm:$0xff]
    %v85 = vld [vmem:[#allocation2 + $0x10] sm:$0xff]
    %v86 = vld [vmem:[#allocation2 + $0x18] sm:$0xff]
    %v87 = vld [vmem:[#allocation2 + $0x20] sm:$0xff]
    %v88 = vld [vmem:[#allocation2 + $0x28] sm:$0xff]
    %v89 = vld [vmem:[#allocation2 + $0x30] sm:$0xff]
    %v90 = vld [vmem:[#allocation2 + $0x38] sm:$0xff]
    %v91 = vld [vmem:[#allocation2 + $0x40] sm:$0xff]
    %v92 = vld [vmem:[#allocation2 + $0x48] sm:$0xff]
    %v93 = vld [vmem:[#allocation2 + $0x50] sm:$0xff]
    %v94 = vld [vmem:[#allocation2 + $0x58] sm:$0xff]
    %v95 = vld [vmem:[#allocation2 + $0x60] sm:$0xff]
    %v96 = vld [vmem:[#allocation2 + $0x68] sm:$0xff]
    %v97 = vld [vmem:[#allocation2 + $0x70] sm:$0xff]
    %v98 = vld [vmem:[#allocation2 + $0x78] sm:$0xff]
    %v99 = vpack.c.bf16 %v84, %v83
    %v100 = vpack.c.bf16 %v86, %v85
    %v101 = vpack.c.bf16 %v88, %v87
    %v102 = vpack.c.bf16 %v90, %v89
    %v103 = vpack.c.bf16 %v92, %v91
    %v104 = vpack.c.bf16 %v94, %v93
    %v105 = vpack.c.bf16 %v96, %v95
    %v106 = vpack.c.bf16 %v98, %v97
    %v107 = vld [vmem:[#allocation5] sm:$0xff]
    %v108 = vld [vmem:[#allocation5 + $0x8] sm:$0xff]
    %v109 = vld [vmem:[#allocation5 + $0x10] sm:$0xff]
    %v110 = vld [vmem:[#allocation5 + $0x18] sm:$0xff]
    %v111 = vld [vmem:[#allocation5 + $0x20] sm:$0xff]
    %v112 = vld [vmem:[#allocation5 + $0x28] sm:$0xff]
    %v113 = vld [vmem:[#allocation5 + $0x30] sm:$0xff]
    %v114 = vld [vmem:[#allocation5 + $0x38] sm:$0xff]
    %v115 = vld [vmem:[#allocation5 + $0x40] sm:$0xff]
    %v116 = vld [vmem:[#allocation5 + $0x48] sm:$0xff]
    %v117 = vld [vmem:[#allocation5 + $0x50] sm:$0xff]
    %v118 = vld [vmem:[#allocation5 + $0x58] sm:$0xff]
    %v119 = vld [vmem:[#allocation5 + $0x60] sm:$0xff]
    %v120 = vld [vmem:[#allocation5 + $0x68] sm:$0xff]
    %v121 = vld [vmem:[#allocation5 + $0x70] sm:$0xff]
    %v122 = vld [vmem:[#allocation5 + $0x78] sm:$0xff]
    %v123 = vld [vmem:[%s2] sm:$0x3]
    %v125 = vlaneseq
    %v126 = vshrl.u32 %v125, 7
    %v127 = vsub.s32 0, %v126
    %v128 = vrot.slane %v123, %v127
    %v129 = vlaneseq
    %v130 = vshrl.u32 %v129, 7
    %v131 = vsub.s32 1, %v130
    %v132 = vrot.slane %v123, %v131
    %v151 = vunpack.c.l.b16 %v107
    %v152 = vunpack.c.h.b16 %v107
    %v153 = vunpack.c.l.b16 %v108
    %v154 = vunpack.c.h.b16 %v108
    %v155 = vunpack.c.l.b16 %v109
    %v156 = vunpack.c.h.b16 %v109
    %v157 = vunpack.c.l.b16 %v110
    %v158 = vunpack.c.h.b16 %v110
    %v159 = vunpack.c.l.b16 %v111
    %v160 = vunpack.c.h.b16 %v111
    %v161 = vunpack.c.l.b16 %v112
    %v162 = vunpack.c.h.b16 %v112
    %v163 = vunpack.c.l.b16 %v113
    %v164 = vunpack.c.h.b16 %v113
    %v165 = vunpack.c.l.b16 %v114
    %v166 = vunpack.c.h.b16 %v114
    %v167 = vunpack.c.l.b16 %v115
    %v168 = vunpack.c.h.b16 %v115
    %v169 = vunpack.c.l.b16 %v116
    %v170 = vunpack.c.h.b16 %v116
    %v171 = vunpack.c.l.b16 %v117
    %v172 = vunpack.c.h.b16 %v117
    %v173 = vunpack.c.l.b16 %v118
    %v174 = vunpack.c.h.b16 %v118
    %v175 = vunpack.c.l.b16 %v119
    %v176 = vunpack.c.h.b16 %v119
    %v177 = vunpack.c.l.b16 %v120
    %v178 = vunpack.c.h.b16 %v120
    %v179 = vunpack.c.l.b16 %v121
    %v180 = vunpack.c.h.b16 %v121
    %v181 = vunpack.c.l.b16 %v122
    %v182 = vunpack.c.h.b16 %v122
    %v183 = vpack.c.b16 %v153, %v151
    %v184 = vpack.c.b16 %v154, %v152
    %v185 = vpack.c.b16 %v157, %v155
    %v186 = vpack.c.b16 %v158, %v156
    %v187 = vpack.c.b16 %v161, %v159
    %v188 = vpack.c.b16 %v162, %v160
    %v189 = vpack.c.b16 %v165, %v163
    %v190 = vpack.c.b16 %v166, %v164
    %v191 = vpack.c.b16 %v169, %v167
    %v192 = vpack.c.b16 %v170, %v168
    %v193 = vpack.c.b16 %v173, %v171
    %v194 = vpack.c.b16 %v174, %v172
    %v195 = vpack.c.b16 %v177, %v175
    %v196 = vpack.c.b16 %v178, %v176
    %v197 = vpack.c.b16 %v181, %v179
    %v198 = vpack.c.b16 %v182, %v180
    %215 = vmatprep.subr.bf16.mxu0 %v184
    %216 = vmatpush1.bf16.msra.mxu0 %v183
    %217 = vmatprep.subr.bf16.mxu0 %v186
    %218 = vmatpush1.bf16.msra.mxu0 %v185
    %219 = vmatprep.subr.bf16.mxu0 %v188
    %220 = vmatpush1.bf16.msra.mxu0 %v187
    %221 = vmatprep.subr.bf16.mxu0 %v190
    %222 = vmatpush1.bf16.msra.mxu0 %v189
    %223 = vmatprep.subr.bf16.mxu0 %v192
    %224 = vmatpush1.bf16.msra.mxu0 %v191
    %225 = vmatprep.subr.bf16.mxu0 %v194
    %226 = vmatpush1.bf16.msra.mxu0 %v193
    %227 = vmatprep.subr.bf16.mxu0 %v196
    %228 = vmatpush1.bf16.msra.mxu0 %v195
    %229 = vmatprep.subr.bf16.mxu0 %v198
    %230 = vmatpush1.bf16.msra.mxu0 %v197
    %231 = vmatprep.subr.bf16.mxu0 0
    %232 = vmatpush1.bf16.msra.mxu0 0
    %233 = vmatprep.subr.bf16.mxu0 0
    %234 = vmatpush1.bf16.msra.mxu0 0
    %235 = vmatprep.subr.bf16.mxu0 0
    %236 = vmatpush1.bf16.msra.mxu0 0
    %237 = vmatprep.subr.bf16.mxu0 0
    %238 = vmatpush1.bf16.msra.mxu0 0
    %239 = vmatprep.subr.bf16.mxu0 0
    %240 = vmatpush1.bf16.msra.mxu0 0
    %241 = vmatprep.subr.bf16.mxu0 0
    %242 = vmatpush1.bf16.msra.mxu0 0
    %243 = vmatprep.subr.bf16.mxu0 0
    %244 = vmatpush1.bf16.msra.mxu0 0
    %245 = vmatprep.subr.bf16.mxu0 0
    %246 = vmatpush1.bf16.msra.mxu0 0
    %247 = vmatprep.mubr.bf16.mxu0 0
    %248 = vmatmul.mubr.bf16.gmra.mrb[0].mxu0 %v99
    %v249 = vpop.f32.mrb[0].mxu0
    %v250 = vadd.f32 %v128, %v249
    %v251 = vpop.f32.mrb[0].mxu0
    %v252 = vadd.f32 %v132, %v251
    %v253 = vpop.f32.mrb[0].mxu0
    %v254 = vadd.f32 %v128, %v253
    %v255 = vpop.f32.mrb[0].mxu0
    %v256 = vadd.f32 %v132, %v255
    %257 = vmatprep.mubr.bf16.mxu0 0
    %258 = vmatmul.mubr.bf16.gmra.mrb[0].mxu0 %v100
    %v259 = vpop.f32.mrb[0].mxu0
    %v260 = vadd.f32 %v128, %v259
    %v261 = vpop.f32.mrb[0].mxu0
    %v262 = vadd.f32 %v132, %v261
    %v263 = vpop.f32.mrb[0].mxu0
    %v264 = vadd.f32 %v128, %v263
    %v265 = vpop.f32.mrb[0].mxu0
    %v266 = vadd.f32 %v132, %v265
    %267 = vmatprep.mubr.bf16.mxu0 0
    %268 = vmatmul.mubr.bf16.gmra.mrb[0].mxu0 %v101
    %v269 = vpop.f32.mrb[0].mxu0
    %v270 = vadd.f32 %v128, %v269
    %v271 = vpop.f32.mrb[0].mxu0
    %v272 = vadd.f32 %v132, %v271
    %v273 = vpop.f32.mrb[0].mxu0
    %v274 = vadd.f32 %v128, %v273
    %v275 = vpop.f32.mrb[0].mxu0
    %v276 = vadd.f32 %v132, %v275
    %277 = vmatprep.mubr.bf16.mxu0 0
    %278 = vmatmul.mubr.bf16.gmra.mrb[0].mxu0 %v102
    %v279 = vpop.f32.mrb[0].mxu0
    %v280 = vadd.f32 %v128, %v279
    %v281 = vpop.f32.mrb[0].mxu0
    %v282 = vadd.f32 %v132, %v281
    %v283 = vpop.f32.mrb[0].mxu0
    %v284 = vadd.f32 %v128, %v283
    %v285 = vpop.f32.mrb[0].mxu0
    %v286 = vadd.f32 %v132, %v285
    %287 = vmatprep.mubr.bf16.mxu0 0
    %288 = vmatmul.mubr.bf16.gmra.mrb[0].mxu0 %v103
    %v289 = vpop.f32.mrb[0].mxu0
    %v290 = vadd.f32 %v128, %v289
    %v291 = vpop.f32.mrb[0].mxu0
    %v292 = vadd.f32 %v132, %v291
    %v293 = vpop.f32.mrb[0].mxu0
    %v294 = vadd.f32 %v128, %v293
    %v295 = vpop.f32.mrb[0].mxu0
    %v296 = vadd.f32 %v132, %v295
    %297 = vmatprep.mubr.bf16.mxu0 0
    %298 = vmatmul.mubr.bf16.gmra.mrb[0].mxu0 %v104
    %v299 = vpop.f32.mrb[0].mxu0
    %v300 = vadd.f32 %v128, %v299
    %v301 = vpop.f32.mrb[0].mxu0
    %v302 = vadd.f32 %v132, %v301
    %v303 = vpop.f32.mrb[0].mxu0
    %v304 = vadd.f32 %v128, %v303
    %v305 = vpop.f32.mrb[0].mxu0
    %v306 = vadd.f32 %v132, %v305
    %307 = vmatprep.mubr.bf16.mxu0 0
    %308 = vmatmul.mubr.bf16.gmra.mrb[0].mxu0 %v105
    %v309 = vpop.f32.mrb[0].mxu0
    %v310 = vadd.f32 %v128, %v309
    %v311 = vpop.f32.mrb[0].mxu0
    %v312 = vadd.f32 %v132, %v311
    %v313 = vpop.f32.mrb[0].mxu0
    %v314 = vadd.f32 %v128, %v313
    %v315 = vpop.f32.mrb[0].mxu0
    %v316 = vadd.f32 %v132, %v315
    %317 = vmatprep.mubr.bf16.mxu0 0
    %318 = vmatmul.mubr.bf16.gmra.mrb[0].mxu0 %v106
    %v319 = vpop.f32.mrb[0].mxu0
    %v320 = vadd.f32 %v128, %v319
    %v321 = vpop.f32.mrb[0].mxu0
    %v322 = vadd.f32 %v132, %v321
    %v323 = vpop.f32.mrb[0].mxu0
    %v324 = vadd.f32 %v128, %v323
    %v325 = vpop.f32.mrb[0].mxu0
    %v326 = vadd.f32 %v132, %v325
    %327 = vdwg.mxu0
    %v328 = vmax.f32 %v250, 0.0
    %v329 = vmax.f32 %v252, 0.0
    %v330 = vmax.f32 %v254, 0.0
    %v331 = vmax.f32 %v256, 0.0
    %v332 = vmax.f32 %v260, 0.0
    %v333 = vmax.f32 %v262, 0.0
    %v334 = vmax.f32 %v264, 0.0
    %v335 = vmax.f32 %v266, 0.0
    %v336 = vmax.f32 %v270, 0.0
    %v337 = vmax.f32 %v272, 0.0
    %v338 = vmax.f32 %v274, 0.0
    %v339 = vmax.f32 %v276, 0.0
    %v340 = vmax.f32 %v280, 0.0
    %v341 = vmax.f32 %v282, 0.0
    %v342 = vmax.f32 %v284, 0.0
    %v343 = vmax.f32 %v286, 0.0
    %v344 = vmax.f32 %v290, 0.0
    %v345 = vmax.f32 %v292, 0.0
    %v346 = vmax.f32 %v294, 0.0
    %v347 = vmax.f32 %v296, 0.0
    %v348 = vmax.f32 %v300, 0.0
    %v349 = vmax.f32 %v302, 0.0
    %v350 = vmax.f32 %v304, 0.0
    %v351 = vmax.f32 %v306, 0.0
    %v352 = vmax.f32 %v310, 0.0
    %v353 = vmax.f32 %v312, 0.0
    %v354 = vmax.f32 %v314, 0.0
    %v355 = vmax.f32 %v316, 0.0
    %v356 = vmax.f32 %v320, 0.0
    %v357 = vmax.f32 %v322, 0.0
    %v358 = vmax.f32 %v324, 0.0
    %v359 = vmax.f32 %v326, 0.0
    %v360 = vpack.c.bf16 %v330, %v328
    %v361 = vpack.c.bf16 %v331, %v329
    %v362 = vpack.c.bf16 %v334, %v332
    %v363 = vpack.c.bf16 %v335, %v333
    %v364 = vpack.c.bf16 %v338, %v336
    %v365 = vpack.c.bf16 %v339, %v337
    %v366 = vpack.c.bf16 %v342, %v340
    %v367 = vpack.c.bf16 %v343, %v341
    %v368 = vpack.c.bf16 %v346, %v344
    %v369 = vpack.c.bf16 %v347, %v345
    %v370 = vpack.c.bf16 %v350, %v348
    %v371 = vpack.c.bf16 %v351, %v349
    %v372 = vpack.c.bf16 %v354, %v352
    %v373 = vpack.c.bf16 %v355, %v353
    %v374 = vpack.c.bf16 %v358, %v356
    %v375 = vpack.c.bf16 %v359, %v357
    %v376 = vld [vmem:[#allocation7] sm:$0xff]
    %v377 = vld [vmem:[#allocation7 + $0x8] sm:$0xff]
    %v378 = vld [vmem:[#allocation7 + $0x10] sm:$0xff]
    %v379 = vld [vmem:[#allocation7 + $0x18] sm:$0xff]
    %v380 = vld [vmem:[#allocation7 + $0x20] sm:$0xff]
    %v381 = vld [vmem:[#allocation7 + $0x28] sm:$0xff]
    %v382 = vld [vmem:[#allocation7 + $0x30] sm:$0xff]
    %v383 = vld [vmem:[#allocation7 + $0x38] sm:$0xff]
    %v384 = vld [vmem:[#allocation7 + $0x40] sm:$0xff]
    %v385 = vld [vmem:[#allocation7 + $0x48] sm:$0xff]
    %v386 = vld [vmem:[#allocation7 + $0x50] sm:$0xff]
    %v387 = vld [vmem:[#allocation7 + $0x58] sm:$0xff]
    %v388 = vld [vmem:[#allocation7 + $0x60] sm:$0xff]
    %v389 = vld [vmem:[#allocation7 + $0x68] sm:$0xff]
    %v390 = vld [vmem:[#allocation7 + $0x70] sm:$0xff]
    %v391 = vld [vmem:[#allocation7 + $0x78] sm:$0xff]
    %v392 = vld [vmem:[#allocation7 + $0x80] sm:$0xff]
    %v393 = vld [vmem:[#allocation7 + $0x88] sm:$0xff]
    %v394 = vld [vmem:[#allocation7 + $0x90] sm:$0xff]
    %v395 = vld [vmem:[#allocation7 + $0x98] sm:$0xff]
    %v396 = vld [vmem:[#allocation7 + $0xa0] sm:$0xff]
    %v397 = vld [vmem:[#allocation7 + $0xa8] sm:$0xff]
    %v398 = vld [vmem:[#allocation7 + $0xb0] sm:$0xff]
    %v399 = vld [vmem:[#allocation7 + $0xb8] sm:$0xff]
    %v400 = vld [vmem:[#allocation7 + $0xc0] sm:$0xff]
    %v401 = vld [vmem:[#allocation7 + $0xc8] sm:$0xff]
    %v402 = vld [vmem:[#allocation7 + $0xd0] sm:$0xff]
    %v403 = vld [vmem:[#allocation7 + $0xd8] sm:$0xff]
    %v404 = vld [vmem:[#allocation7 + $0xe0] sm:$0xff]
    %v405 = vld [vmem:[#allocation7 + $0xe8] sm:$0xff]
    %v406 = vld [vmem:[#allocation7 + $0xf0] sm:$0xff]
    %v407 = vld [vmem:[#allocation7 + $0xf8] sm:$0xff]
    %v408 = vld [vmem:[%s4] sm:$0x3]
    %v410 = vlaneseq
    %v411 = vshrl.u32 %v410, 7
    %v412 = vsub.s32 0, %v411
    %v413 = vrot.slane %v408, %v412
    %v414 = vlaneseq
    %v415 = vshrl.u32 %v414, 7
    %v416 = vsub.s32 1, %v415
    %v417 = vrot.slane %v408, %v416
    %v452 = vunpack.c.l.b16 %v376
    %v453 = vunpack.c.h.b16 %v376
    %v454 = vunpack.c.l.b16 %v377
    %v455 = vunpack.c.h.b16 %v377
    %v456 = vunpack.c.l.b16 %v378
    %v457 = vunpack.c.h.b16 %v378
    %v458 = vunpack.c.l.b16 %v379
    %v459 = vunpack.c.h.b16 %v379
    %v460 = vunpack.c.l.b16 %v380
    %v461 = vunpack.c.h.b16 %v380
    %v462 = vunpack.c.l.b16 %v381
    %v463 = vunpack.c.h.b16 %v381
    %v464 = vunpack.c.l.b16 %v382
    %v465 = vunpack.c.h.b16 %v382
    %v466 = vunpack.c.l.b16 %v383
    %v467 = vunpack.c.h.b16 %v383
    %v468 = vunpack.c.l.b16 %v384
    %v469 = vunpack.c.h.b16 %v384
    %v470 = vunpack.c.l.b16 %v385
    %v471 = vunpack.c.h.b16 %v385
    %v472 = vunpack.c.l.b16 %v386
    %v473 = vunpack.c.h.b16 %v386
    %v474 = vunpack.c.l.b16 %v387
    %v475 = vunpack.c.h.b16 %v387
    %v476 = vunpack.c.l.b16 %v388
    %v477 = vunpack.c.h.b16 %v388
    %v478 = vunpack.c.l.b16 %v389
    %v479 = vunpack.c.h.b16 %v389
    %v480 = vunpack.c.l.b16 %v390
    %v481 = vunpack.c.h.b16 %v390
    %v482 = vunpack.c.l.b16 %v391
    %v483 = vunpack.c.h.b16 %v391
    %v484 = vunpack.c.l.b16 %v392
    %v485 = vunpack.c.h.b16 %v392
    %v486 = vunpack.c.l.b16 %v393
    %v487 = vunpack.c.h.b16 %v393
    %v488 = vunpack.c.l.b16 %v394
    %v489 = vunpack.c.h.b16 %v394
    %v490 = vunpack.c.l.b16 %v395
    %v491 = vunpack.c.h.b16 %v395
    %v492 = vunpack.c.l.b16 %v396
    %v493 = vunpack.c.h.b16 %v396
    %v494 = vunpack.c.l.b16 %v397
    %v495 = vunpack.c.h.b16 %v397
    %v496 = vunpack.c.l.b16 %v398
    %v497 = vunpack.c.h.b16 %v398
    %v498 = vunpack.c.l.b16 %v399
    %v499 = vunpack.c.h.b16 %v399
    %v500 = vunpack.c.l.b16 %v400
    %v501 = vunpack.c.h.b16 %v400
    %v502 = vunpack.c.l.b16 %v401
    %v503 = vunpack.c.h.b16 %v401
    %v504 = vunpack.c.l.b16 %v402
    %v505 = vunpack.c.h.b16 %v402
    %v506 = vunpack.c.l.b16 %v403
    %v507 = vunpack.c.h.b16 %v403
    %v508 = vunpack.c.l.b16 %v404
    %v509 = vunpack.c.h.b16 %v404
    %v510 = vunpack.c.l.b16 %v405
    %v511 = vunpack.c.h.b16 %v405
    %v512 = vunpack.c.l.b16 %v406
    %v513 = vunpack.c.h.b16 %v406
    %v514 = vunpack.c.l.b16 %v407
    %v515 = vunpack.c.h.b16 %v407
    %v516 = vpack.c.b16 %v454, %v452
    %v517 = vpack.c.b16 %v455, %v453
    %v518 = vpack.c.b16 %v458, %v456
    %v519 = vpack.c.b16 %v459, %v457
    %v520 = vpack.c.b16 %v462, %v460
    %v521 = vpack.c.b16 %v463, %v461
    %v522 = vpack.c.b16 %v466, %v464
    %v523 = vpack.c.b16 %v467, %v465
    %v524 = vpack.c.b16 %v470, %v468
    %v525 = vpack.c.b16 %v471, %v469
    %v526 = vpack.c.b16 %v474, %v472
    %v527 = vpack.c.b16 %v475, %v473
    %v528 = vpack.c.b16 %v478, %v476
    %v529 = vpack.c.b16 %v479, %v477
    %v530 = vpack.c.b16 %v482, %v480
    %v531 = vpack.c.b16 %v483, %v481
    %v532 = vpack.c.b16 %v486, %v484
    %v533 = vpack.c.b16 %v487, %v485
    %v534 = vpack.c.b16 %v490, %v488
    %v535 = vpack.c.b16 %v491, %v489
    %v536 = vpack.c.b16 %v494, %v492
    %v537 = vpack.c.b16 %v495, %v493
    %v538 = vpack.c.b16 %v498, %v496
    %v539 = vpack.c.b16 %v499, %v497
    %v540 = vpack.c.b16 %v502, %v500
    %v541 = vpack.c.b16 %v503, %v501
    %v542 = vpack.c.b16 %v506, %v504
    %v543 = vpack.c.b16 %v507, %v505
    %v544 = vpack.c.b16 %v510, %v508
    %v545 = vpack.c.b16 %v511, %v509
    %v546 = vpack.c.b16 %v514, %v512
    %v547 = vpack.c.b16 %v515, %v513
    %580 = vmatprep.subr.bf16.mxu0 %v517
    %581 = vmatpush1.bf16.msra.mxu0 %v516
    %582 = vmatprep.subr.bf16.mxu0 %v519
    %583 = vmatpush1.bf16.msra.mxu0 %v518
    %584 = vmatprep.subr.bf16.mxu0 %v521
    %585 = vmatpush1.bf16.msra.mxu0 %v520
    %586 = vmatprep.subr.bf16.mxu0 %v523
    %587 = vmatpush1.bf16.msra.mxu0 %v522
    %588 = vmatprep.subr.bf16.mxu0 %v525
    %589 = vmatpush1.bf16.msra.mxu0 %v524
    %590 = vmatprep.subr.bf16.mxu0 %v527
    %591 = vmatpush1.bf16.msra.mxu0 %v526
    %592 = vmatprep.subr.bf16.mxu0 %v529
    %593 = vmatpush1.bf16.msra.mxu0 %v528
    %594 = vmatprep.subr.bf16.mxu0 %v531
    %595 = vmatpush1.bf16.msra.mxu0 %v530
    %596 = vmatprep.subr.bf16.mxu0 %v533
    %597 = vmatpush1.bf16.msra.mxu0 %v532
    %598 = vmatprep.subr.bf16.mxu0 %v535
    %599 = vmatpush1.bf16.msra.mxu0 %v534
    %600 = vmatprep.subr.bf16.mxu0 %v537
    %601 = vmatpush1.bf16.msra.mxu0 %v536
    %602 = vmatprep.subr.bf16.mxu0 %v539
    %603 = vmatpush1.bf16.msra.mxu0 %v538
    %604 = vmatprep.subr.bf16.mxu0 %v541
    %605 = vmatpush1.bf16.msra.mxu0 %v540
    %606 = vmatprep.subr.bf16.mxu0 %v543
    %607 = vmatpush1.bf16.msra.mxu0 %v542
    %608 = vmatprep.subr.bf16.mxu0 %v545
    %609 = vmatpush1.bf16.msra.mxu0 %v544
    %610 = vmatprep.subr.bf16.mxu0 %v547
    %611 = vmatpush1.bf16.msra.mxu0 %v546
    %612 = vmatprep.mubr.bf16.mxu0 %v361
    %613 = vmatmul.mubr.bf16.gmra.mrb[0].mxu0 %v360
    %v614 = vpop.f32.mrb[0].mxu0
    %v615 = vadd.f32 %v413, %v614
    %v616 = vpop.f32.mrb[0].mxu0
    %v617 = vadd.f32 %v417, %v616
    %v618 = vpop.f32.mrb[0].mxu0
    %v619 = vadd.f32 %v413, %v618
    %v620 = vpop.f32.mrb[0].mxu0
    %v621 = vadd.f32 %v417, %v620
    %622 = vmatprep.mubr.bf16.mxu0 %v363
    %623 = vmatmul.mubr.bf16.gmra.mrb[0].mxu0 %v362
    %v624 = vpop.f32.mrb[0].mxu0
    %v625 = vadd.f32 %v413, %v624
    %v626 = vpop.f32.mrb[0].mxu0
    %v627 = vadd.f32 %v417, %v626
    %v628 = vpop.f32.mrb[0].mxu0
    %v629 = vadd.f32 %v413, %v628
    %v630 = vpop.f32.mrb[0].mxu0
    %v631 = vadd.f32 %v417, %v630
    %632 = vmatprep.mubr.bf16.mxu0 %v365
    %633 = vmatmul.mubr.bf16.gmra.mrb[0].mxu0 %v364
    %v634 = vpop.f32.mrb[0].mxu0
    %v635 = vadd.f32 %v413, %v634
    %v636 = vpop.f32.mrb[0].mxu0
    %v637 = vadd.f32 %v417, %v636
    %v638 = vpop.f32.mrb[0].mxu0
    %v639 = vadd.f32 %v413, %v638
    %v640 = vpop.f32.mrb[0].mxu0
    %v641 = vadd.f32 %v417, %v640
    %642 = vmatprep.mubr.bf16.mxu0 %v367
    %643 = vmatmul.mubr.bf16.gmra.mrb[0].mxu0 %v366
    %v644 = vpop.f32.mrb[0].mxu0
    %v645 = vadd.f32 %v413, %v644
    %v646 = vpop.f32.mrb[0].mxu0
    %v647 = vadd.f32 %v417, %v646
    %v648 = vpop.f32.mrb[0].mxu0
    %v649 = vadd.f32 %v413, %v648
    %v650 = vpop.f32.mrb[0].mxu0
    %v651 = vadd.f32 %v417, %v650
    %652 = vmatprep.mubr.bf16.mxu0 %v369
    %653 = vmatmul.mubr.bf16.gmra.mrb[0].mxu0 %v368
    %v654 = vpop.f32.mrb[0].mxu0
    %v655 = vadd.f32 %v413, %v654
    %v656 = vpop.f32.mrb[0].mxu0
    %v657 = vadd.f32 %v417, %v656
    %v658 = vpop.f32.mrb[0].mxu0
    %v659 = vadd.f32 %v413, %v658
    %v660 = vpop.f32.mrb[0].mxu0
    %v661 = vadd.f32 %v417, %v660
    %662 = vmatprep.mubr.bf16.mxu0 %v371
    %663 = vmatmul.mubr.bf16.gmra.mrb[0].mxu0 %v370
    %v664 = vpop.f32.mrb[0].mxu0
    %v665 = vadd.f32 %v413, %v664
    %v666 = vpop.f32.mrb[0].mxu0
    %v667 = vadd.f32 %v417, %v666
    %v668 = vpop.f32.mrb[0].mxu0
    %v669 = vadd.f32 %v413, %v668
    %v670 = vpop.f32.mrb[0].mxu0
    %v671 = vadd.f32 %v417, %v670
    %672 = vmatprep.mubr.bf16.mxu0 %v373
    %673 = vmatmul.mubr.bf16.gmra.mrb[0].mxu0 %v372
    %v674 = vpop.f32.mrb[0].mxu0
    %v675 = vadd.f32 %v413, %v674
    %v676 = vpop.f32.mrb[0].mxu0
    %v677 = vadd.f32 %v417, %v676
    %v678 = vpop.f32.mrb[0].mxu0
    %v679 = vadd.f32 %v413, %v678
    %v680 = vpop.f32.mrb[0].mxu0
    %v681 = vadd.f32 %v417, %v680
    %682 = vmatprep.mubr.bf16.mxu0 %v375
    %683 = vmatmul.mubr.bf16.gmra.mrb[0].mxu0 %v374
    %v684 = vpop.f32.mrb[0].mxu0
    %v685 = vadd.f32 %v413, %v684
    %v686 = vpop.f32.mrb[0].mxu0
    %v687 = vadd.f32 %v417, %v686
    %v688 = vpop.f32.mrb[0].mxu0
    %v689 = vadd.f32 %v413, %v688
    %v690 = vpop.f32.mrb[0].mxu0
    %v691 = vadd.f32 %v417, %v690
    %692 = vdwg.mxu0
    %v693 = vmax.f32 %v615, 0.0
    %v694 = vmax.f32 %v617, 0.0
    %v695 = vmax.f32 %v619, 0.0
    %v696 = vmax.f32 %v621, 0.0
    %v697 = vmax.f32 %v625, 0.0
    %v698 = vmax.f32 %v627, 0.0
    %v699 = vmax.f32 %v629, 0.0
    %v700 = vmax.f32 %v631, 0.0
    %v701 = vmax.f32 %v635, 0.0
    %v702 = vmax.f32 %v637, 0.0
    %v703 = vmax.f32 %v639, 0.0
    %v704 = vmax.f32 %v641, 0.0
    %v705 = vmax.f32 %v645, 0.0
    %v706 = vmax.f32 %v647, 0.0
    %v707 = vmax.f32 %v649, 0.0
    %v708 = vmax.f32 %v651, 0.0
    %v709 = vmax.f32 %v655, 0.0
    %v710 = vmax.f32 %v657, 0.0
    %v711 = vmax.f32 %v659, 0.0
    %v712 = vmax.f32 %v661, 0.0
    %v713 = vmax.f32 %v665, 0.0
    %v714 = vmax.f32 %v667, 0.0
    %v715 = vmax.f32 %v669, 0.0
    %v716 = vmax.f32 %v671, 0.0
    %v717 = vmax.f32 %v675, 0.0
    %v718 = vmax.f32 %v677, 0.0
    %v719 = vmax.f32 %v679, 0.0
    %v720 = vmax.f32 %v681, 0.0
    %v721 = vmax.f32 %v685, 0.0
    %v722 = vmax.f32 %v687, 0.0
    %v723 = vmax.f32 %v689, 0.0
    %v724 = vmax.f32 %v691, 0.0
    %v725 = vpack.c.bf16 %v695, %v693
    %v726 = vpack.c.bf16 %v696, %v694
    %v727 = vpack.c.bf16 %v699, %v697
    %v728 = vpack.c.bf16 %v700, %v698
    %v729 = vpack.c.bf16 %v703, %v701
    %v730 = vpack.c.bf16 %v704, %v702
    %v731 = vpack.c.bf16 %v707, %v705
    %v732 = vpack.c.bf16 %v708, %v706
    %v733 = vpack.c.bf16 %v711, %v709
    %v734 = vpack.c.bf16 %v712, %v710
    %v735 = vpack.c.bf16 %v715, %v713
    %v736 = vpack.c.bf16 %v716, %v714
    %v737 = vpack.c.bf16 %v719, %v717
    %v738 = vpack.c.bf16 %v720, %v718
    %v739 = vpack.c.bf16 %v723, %v721
    %v740 = vpack.c.bf16 %v724, %v722
    %v741 = vld [vmem:[#allocation8] sm:$0xf]
    %v742 = vld [vmem:[#allocation8 + $0x4] sm:$0xf]
    %v743 = vld [vmem:[#allocation8 + $0x8] sm:$0xf]
    %v744 = vld [vmem:[#allocation8 + $0xc] sm:$0xf]
    %v745 = vld [vmem:[#allocation8 + $0x10] sm:$0xf]
    %v746 = vld [vmem:[#allocation8 + $0x14] sm:$0xf]
    %v747 = vld [vmem:[#allocation8 + $0x18] sm:$0xf]
    %v748 = vld [vmem:[#allocation8 + $0x1c] sm:$0xf]
    %v749 = vld [vmem:[#allocation8 + $0x20] sm:$0xf]
    %v750 = vld [vmem:[#allocation8 + $0x24] sm:$0xf]
    %v751 = vld [vmem:[#allocation8 + $0x28] sm:$0xf]
    %v752 = vld [vmem:[#allocation8 + $0x2c] sm:$0xf]
    %v753 = vld [vmem:[#allocation8 + $0x30] sm:$0xf]
    %v754 = vld [vmem:[#allocation8 + $0x34] sm:$0xf]
    %v755 = vld [vmem:[#allocation8 + $0x38] sm:$0xf]
    %v756 = vld [vmem:[#allocation8 + $0x3c] sm:$0xf]
    %v757 = vld [vmem:[#allocation8 + $0x40] sm:$0xf]
    %v758 = vld [vmem:[#allocation8 + $0x44] sm:$0xf]
    %v759 = vld [vmem:[#allocation8 + $0x48] sm:$0xf]
    %v760 = vld [vmem:[#allocation8 + $0x4c] sm:$0xf]
    %v761 = vld [vmem:[#allocation8 + $0x50] sm:$0xf]
    %v762 = vld [vmem:[#allocation8 + $0x54] sm:$0xf]
    %v763 = vld [vmem:[#allocation8 + $0x58] sm:$0xf]
    %v764 = vld [vmem:[#allocation8 + $0x5c] sm:$0xf]
    %v765 = vld [vmem:[#allocation8 + $0x60] sm:$0xf]
    %v766 = vld [vmem:[#allocation8 + $0x64] sm:$0xf]
    %v767 = vld [vmem:[#allocation8 + $0x68] sm:$0xf]
    %v768 = vld [vmem:[#allocation8 + $0x6c] sm:$0xf]
    %v769 = vld [vmem:[#allocation8 + $0x70] sm:$0xf]
    %v770 = vld [vmem:[#allocation8 + $0x74] sm:$0xf]
    %v771 = vld [vmem:[#allocation8 + $0x78] sm:$0xf]
    %v772 = vld [vmem:[#allocation8 + $0x7c] sm:$0xf]
    %v773 = vld [vmem:[%s6] sm:$0x1]
    %v775 = vlaneseq
    %v776 = vshrl.u32 %v775, 7
    %v777 = vsub.s32 0, %v776
    %v778 = vrot.slane %v773, %v777
    %v812 = vunpack.c.l.b16 %v741
    %v813 = vunpack.c.l.b16 %v742
    %v814 = vunpack.c.l.b16 %v743
    %v815 = vunpack.c.l.b16 %v744
    %v816 = vunpack.c.l.b16 %v745
    %v817 = vunpack.c.l.b16 %v746
    %v818 = vunpack.c.l.b16 %v747
    %v819 = vunpack.c.l.b16 %v748
    %v820 = vunpack.c.l.b16 %v749
    %v821 = vunpack.c.l.b16 %v750
    %v822 = vunpack.c.l.b16 %v751
    %v823 = vunpack.c.l.b16 %v752
    %v824 = vunpack.c.l.b16 %v753
    %v825 = vunpack.c.l.b16 %v754
    %v826 = vunpack.c.l.b16 %v755
    %v827 = vunpack.c.l.b16 %v756
    %v828 = vunpack.c.l.b16 %v757
    %v829 = vunpack.c.l.b16 %v758
    %v830 = vunpack.c.l.b16 %v759
    %v831 = vunpack.c.l.b16 %v760
    %v832 = vunpack.c.l.b16 %v761
    %v833 = vunpack.c.l.b16 %v762
    %v834 = vunpack.c.l.b16 %v763
    %v835 = vunpack.c.l.b16 %v764
    %v836 = vunpack.c.l.b16 %v765
    %v837 = vunpack.c.l.b16 %v766
    %v838 = vunpack.c.l.b16 %v767
    %v839 = vunpack.c.l.b16 %v768
    %v840 = vunpack.c.l.b16 %v769
    %v841 = vunpack.c.l.b16 %v770
    %v842 = vunpack.c.l.b16 %v771
    %v843 = vunpack.c.l.b16 %v772
    %v844 = vpack.c.b16 %v813, %v812
    %v845 = vpack.c.b16 %v815, %v814
    %v846 = vpack.c.b16 %v817, %v816
    %v847 = vpack.c.b16 %v819, %v818
    %v848 = vpack.c.b16 %v821, %v820
    %v849 = vpack.c.b16 %v823, %v822
    %v850 = vpack.c.b16 %v825, %v824
    %v851 = vpack.c.b16 %v827, %v826
    %v852 = vpack.c.b16 %v829, %v828
    %v853 = vpack.c.b16 %v831, %v830
    %v854 = vpack.c.b16 %v833, %v832
    %v855 = vpack.c.b16 %v835, %v834
    %v856 = vpack.c.b16 %v837, %v836
    %v857 = vpack.c.b16 %v839, %v838
    %v858 = vpack.c.b16 %v841, %v840
    %v859 = vpack.c.b16 %v843, %v842
    %876 = vmatprep.subr.bf16.mxu0 0
    %877 = vmatpush1.bf16.msra.mxu0 %v844
    %878 = vmatprep.subr.bf16.mxu0 0
    %879 = vmatpush1.bf16.msra.mxu0 %v845
    %880 = vmatprep.subr.bf16.mxu0 0
    %881 = vmatpush1.bf16.msra.mxu0 %v846
    %882 = vmatprep.subr.bf16.mxu0 0
    %883 = vmatpush1.bf16.msra.mxu0 %v847
    %884 = vmatprep.subr.bf16.mxu0 0
    %885 = vmatpush1.bf16.msra.mxu0 %v848
    %886 = vmatprep.subr.bf16.mxu0 0
    %887 = vmatpush1.bf16.msra.mxu0 %v849
    %888 = vmatprep.subr.bf16.mxu0 0
    %889 = vmatpush1.bf16.msra.mxu0 %v850
    %890 = vmatprep.subr.bf16.mxu0 0
    %891 = vmatpush1.bf16.msra.mxu0 %v851
    %892 = vmatprep.subr.bf16.mxu0 0
    %893 = vmatpush1.bf16.msra.mxu0 %v852
    %894 = vmatprep.subr.bf16.mxu0 0
    %895 = vmatpush1.bf16.msra.mxu0 %v853
    %896 = vmatprep.subr.bf16.mxu0 0
    %897 = vmatpush1.bf16.msra.mxu0 %v854
    %898 = vmatprep.subr.bf16.mxu0 0
    %899 = vmatpush1.bf16.msra.mxu0 %v855
    %900 = vmatprep.subr.bf16.mxu0 0
    %901 = vmatpush1.bf16.msra.mxu0 %v856
    %902 = vmatprep.subr.bf16.mxu0 0
    %903 = vmatpush1.bf16.msra.mxu0 %v857
    %904 = vmatprep.subr.bf16.mxu0 0
    %905 = vmatpush1.bf16.msra.mxu0 %v858
    %906 = vmatprep.subr.bf16.mxu0 0
    %907 = vmatpush1.bf16.msra.mxu0 %v859
    %908 = vmatprep.mubr.bf16.mxu0 %v726
    %909 = vmatmul.mubr.bf16.gmra.mrb[0].mxu0 %v725
    %v910 = vpop.f32.mrb[0].mxu0
    %v911 = vadd.f32 %v778, %v910
    %v912 = vpop.f32.mrb[0].mxu0
    %v913 = vpop.f32.mrb[0].mxu0
    %v914 = vadd.f32 %v778, %v913
    %v915 = vpop.f32.mrb[0].mxu0
    %916 = vmatprep.mubr.bf16.mxu0 %v728
    %917 = vmatmul.mubr.bf16.gmra.mrb[0].mxu0 %v727
    %v918 = vpop.f32.mrb[0].mxu0
    %v919 = vadd.f32 %v778, %v918
    %v920 = vpop.f32.mrb[0].mxu0
    %v921 = vpop.f32.mrb[0].mxu0
    %v922 = vadd.f32 %v778, %v921
    %v923 = vpop.f32.mrb[0].mxu0
    %924 = vmatprep.mubr.bf16.mxu0 %v730
    %925 = vmatmul.mubr.bf16.gmra.mrb[0].mxu0 %v729
    %v926 = vpop.f32.mrb[0].mxu0
    %v927 = vadd.f32 %v778, %v926
    %v928 = vpop.f32.mrb[0].mxu0
    %v929 = vpop.f32.mrb[0].mxu0
    %v930 = vadd.f32 %v778, %v929
    %v931 = vpop.f32.mrb[0].mxu0
    %932 = vmatprep.mubr.bf16.mxu0 %v732
    %933 = vmatmul.mubr.bf16.gmra.mrb[0].mxu0 %v731
    %v934 = vpop.f32.mrb[0].mxu0
    %v935 = vadd.f32 %v778, %v934
    %v936 = vpop.f32.mrb[0].mxu0
    %v937 = vpop.f32.mrb[0].mxu0
    %v938 = vadd.f32 %v778, %v937
    %v939 = vpop.f32.mrb[0].mxu0
    %940 = vmatprep.mubr.bf16.mxu0 %v734
    %941 = vmatmul.mubr.bf16.gmra.mrb[0].mxu0 %v733
    %v942 = vpop.f32.mrb[0].mxu0
    %v943 = vadd.f32 %v778, %v942
    %v944 = vpop.f32.mrb[0].mxu0
    %v945 = vpop.f32.mrb[0].mxu0
    %v946 = vadd.f32 %v778, %v945
    %v947 = vpop.f32.mrb[0].mxu0
    %948 = vmatprep.mubr.bf16.mxu0 %v736
    %949 = vmatmul.mubr.bf16.gmra.mrb[0].mxu0 %v735
    %v950 = vpop.f32.mrb[0].mxu0
    %v951 = vadd.f32 %v778, %v950
    %v952 = vpop.f32.mrb[0].mxu0
    %v953 = vpop.f32.mrb[0].mxu0
    %v954 = vadd.f32 %v778, %v953
    %v955 = vpop.f32.mrb[0].mxu0
    %956 = vmatprep.mubr.bf16.mxu0 %v738
    %957 = vmatmul.mubr.bf16.gmra.mrb[0].mxu0 %v737
    %v958 = vpop.f32.mrb[0].mxu0
    %v959 = vadd.f32 %v778, %v958
    %v960 = vpop.f32.mrb[0].mxu0
    %v961 = vpop.f32.mrb[0].mxu0
    %v962 = vadd.f32 %v778, %v961
    %v963 = vpop.f32.mrb[0].mxu0
    %964 = vmatprep.mubr.bf16.mxu0 %v740
    %965 = vmatmul.mubr.bf16.gmra.mrb[0].mxu0 %v739
    %v966 = vpop.f32.mrb[0].mxu0
    %v967 = vadd.f32 %v778, %v966
    %v968 = vpop.f32.mrb[0].mxu0
    %v969 = vpop.f32.mrb[0].mxu0
    %v970 = vadd.f32 %v778, %v969
    %v971 = vpop.f32.mrb[0].mxu0
    %972 = vdwg.mxu0
    %v973 = vsub.f32 0.0, %v911
    %v974 = vsub.f32 0.0, %v914
    %v975 = vsub.f32 0.0, %v919
    %v976 = vsub.f32 0.0, %v922
    %v977 = vsub.f32 0.0, %v927
    %v978 = vsub.f32 0.0, %v930
    %v979 = vsub.f32 0.0, %v935
    %v980 = vsub.f32 0.0, %v938
    %v981 = vsub.f32 0.0, %v943
    %v982 = vsub.f32 0.0, %v946
    %v983 = vsub.f32 0.0, %v951
    %v984 = vsub.f32 0.0, %v954
    %v985 = vsub.f32 0.0, %v959
    %v986 = vsub.f32 0.0, %v962
    %v987 = vsub.f32 0.0, %v967
    %v988 = vsub.f32 0.0, %v970
    %v989 = vmul.f32 %v973, 1.442695
    %v990 = vpow.pop %v989
    %v991 = vmul.f32 %v974, 1.442695
    %v992 = vpow.pop %v991
    %v993 = vmul.f32 %v975, 1.442695
    %v994 = vpow.pop %v993
    %v995 = vmul.f32 %v976, 1.442695
    %v996 = vpow.pop %v995
    %v997 = vmul.f32 %v977, 1.442695
    %v998 = vpow.pop %v997
    %v999 = vmul.f32 %v978, 1.442695
    %v1000 = vpow.pop %v999
    %v1001 = vmul.f32 %v979, 1.442695
    %v1002 = vpow.pop %v1001
    %v1003 = vmul.f32 %v980, 1.442695
    %v1004 = vpow.pop %v1003
    %v1005 = vmul.f32 %v981, 1.442695
    %v1006 = vpow.pop %v1005
    %v1007 = vmul.f32 %v982, 1.442695
    %v1008 = vpow.pop %v1007
    %v1009 = vmul.f32 %v983, 1.442695
    %v1010 = vpow.pop %v1009
    %v1011 = vmul.f32 %v984, 1.442695
    %v1012 = vpow.pop %v1011
    %v1013 = vmul.f32 %v985, 1.442695
    %v1014 = vpow.pop %v1013
    %v1015 = vmul.f32 %v986, 1.442695
    %v1016 = vpow.pop %v1015
    %v1017 = vmul.f32 %v987, 1.442695
    %v1018 = vpow.pop %v1017
    %v1019 = vmul.f32 %v988, 1.442695
    %v1020 = vpow.pop %v1019
    %v1021 = vadd.f32 %v990, 1.0
    %v1022 = vadd.f32 %v992, 1.0
    %v1023 = vadd.f32 %v994, 1.0
    %v1024 = vadd.f32 %v996, 1.0
    %v1025 = vadd.f32 %v998, 1.0
    %v1026 = vadd.f32 %v1000, 1.0
    %v1027 = vadd.f32 %v1002, 1.0
    %v1028 = vadd.f32 %v1004, 1.0
    %v1029 = vadd.f32 %v1006, 1.0
    %v1030 = vadd.f32 %v1008, 1.0
    %v1031 = vadd.f32 %v1010, 1.0
    %v1032 = vadd.f32 %v1012, 1.0
    %v1033 = vadd.f32 %v1014, 1.0
    %v1034 = vadd.f32 %v1016, 1.0
    %v1035 = vadd.f32 %v1018, 1.0
    %v1036 = vadd.f32 %v1020, 1.0
    %v1037 = vrcp.pop %v1021
    %v1038 = vrcp.pop %v1022
    %v1039 = vrcp.pop %v1023
    %v1040 = vrcp.pop %v1024
    %v1041 = vrcp.pop %v1025
    %v1042 = vrcp.pop %v1026
    %v1043 = vrcp.pop %v1027
    %v1044 = vrcp.pop %v1028
    %v1045 = vrcp.pop %v1029
    %v1046 = vrcp.pop %v1030
    %v1047 = vrcp.pop %v1031
    %v1048 = vrcp.pop %v1032
    %v1049 = vrcp.pop %v1033
    %v1050 = vrcp.pop %v1034
    %v1051 = vrcp.pop %v1035
    %v1052 = vrcp.pop %v1036
    %v1053 = vmul.f32 %v1021, %v1037
    %v1054 = vmul.f32 %v1022, %v1038
    %v1055 = vmul.f32 %v1023, %v1039
    %v1056 = vmul.f32 %v1024, %v1040
    %v1057 = vmul.f32 %v1025, %v1041
    %v1058 = vmul.f32 %v1026, %v1042
    %v1059 = vmul.f32 %v1027, %v1043
    %v1060 = vmul.f32 %v1028, %v1044
    %v1061 = vmul.f32 %v1029, %v1045
    %v1062 = vmul.f32 %v1030, %v1046
    %v1063 = vmul.f32 %v1031, %v1047
    %v1064 = vmul.f32 %v1032, %v1048
    %v1065 = vmul.f32 %v1033, %v1049
    %v1066 = vmul.f32 %v1034, %v1050
    %v1067 = vmul.f32 %v1035, %v1051
    %v1068 = vmul.f32 %v1036, %v1052
    %v1069 = vsub.f32 2.0, %v1053
    %v1070 = vsub.f32 2.0, %v1054
    %v1071 = vsub.f32 2.0, %v1055
    %v1072 = vsub.f32 2.0, %v1056
    %v1073 = vsub.f32 2.0, %v1057
    %v1074 = vsub.f32 2.0, %v1058
    %v1075 = vsub.f32 2.0, %v1059
    %v1076 = vsub.f32 2.0, %v1060
    %v1077 = vsub.f32 2.0, %v1061
    %v1078 = vsub.f32 2.0, %v1062
    %v1079 = vsub.f32 2.0, %v1063
    %v1080 = vsub.f32 2.0, %v1064
    %v1081 = vsub.f32 2.0, %v1065
    %v1082 = vsub.f32 2.0, %v1066
    %v1083 = vsub.f32 2.0, %v1067
    %v1084 = vsub.f32 2.0, %v1068
    %v1085 = vmul.f32 %v1037, %v1069
    %v1086 = vmul.f32 %v1038, %v1070
    %v1087 = vmul.f32 %v1039, %v1071
    %v1088 = vmul.f32 %v1040, %v1072
    %v1089 = vmul.f32 %v1041, %v1073
    %v1090 = vmul.f32 %v1042, %v1074
    %v1091 = vmul.f32 %v1043, %v1075
    %v1092 = vmul.f32 %v1044, %v1076
    %v1093 = vmul.f32 %v1045, %v1077
    %v1094 = vmul.f32 %v1046, %v1078
    %v1095 = vmul.f32 %v1047, %v1079
    %v1096 = vmul.f32 %v1048, %v1080
    %v1097 = vmul.f32 %v1049, %v1081
    %v1098 = vmul.f32 %v1050, %v1082
    %v1099 = vmul.f32 %v1051, %v1083
    %v1100 = vmul.f32 %v1052, %v1084
    %1101 = vst [vmem:[#allocation10] sm:$0xff] %v1085
    %1102 = vst [vmem:[#allocation10 + $0x8] sm:$0xff] %v1086
    %1103 = vst [vmem:[#allocation10 + $0x10] sm:$0xff] %v1087
    %1104 = vst [vmem:[#allocation10 + $0x18] sm:$0xff] %v1088
    %1105 = vst [vmem:[#allocation10 + $0x20] sm:$0xff] %v1089
    %1106 = vst [vmem:[#allocation10 + $0x28] sm:$0xff] %v1090
    %1107 = vst [vmem:[#allocation10 + $0x30] sm:$0xff] %v1091
    %1108 = vst [vmem:[#allocation10 + $0x38] sm:$0xff] %v1092
    %1109 = vst [vmem:[#allocation10 + $0x40] sm:$0xff] %v1093
    %1110 = vst [vmem:[#allocation10 + $0x48] sm:$0xff] %v1094
    %1111 = vst [vmem:[#allocation10 + $0x50] sm:$0xff] %v1095
    %1112 = vst [vmem:[#allocation10 + $0x58] sm:$0xff] %v1096
    %1113 = vst [vmem:[#allocation10 + $0x60] sm:$0xff] %v1097
    %1114 = vst [vmem:[#allocation10 + $0x68] sm:$0xff] %v1098
    %1115 = vst [vmem:[#allocation10 + $0x70] sm:$0xff] %v1099
    %1116 = vst [vmem:[#allocation10 + $0x78] sm:$0xff] %v1100
    // Predicated region
    $region46: #{tpu_custom_call.1} parent=1 // pred_check
      _
    $region47: #{tpu_custom_call.1} parent=1 // pred_check_branch
      %1118 = sbr.rel (0) target = $region49
    $region48: #{tpu_custom_call.1} parent=1 // pred_region
      %s1120 = ssub.s32 2048, 2048
      %1121 = vsyncadd [#allocation4], %s1120
      %s1122 = sshll.u32 [#allocation10], 4
      %s1123 = int_to_ptr.vmem [resolvable:$true] %s1122
      %1128 = dma.vmem_to_hbm [thread:$0]  %s1123, 2048, %s7, [#allocation4], 128, 128, 8
    $region49: #{tpu_custom_call.1} parent=1 // pred_fallthru
      _
    // Predicated region
    $region50: #{tpu_custom_call.1} parent=1 // pred_check
      _
    $region51: #{tpu_custom_call.1} parent=1 // pred_check_branch
      %1130 = sbr.rel (0) target = $region53
    $region52: #{tpu_custom_call.1} parent=1 // pred_region
      %1131 = dma.done [#allocation4], 2048
    $region53: #{tpu_custom_call.1} parent=1 // pred_fallthru
      _
    %1132 = vsyncpa [#allocation3], 1
    %1133 = vsyncpa [#allocation6], 1
    %1134 = vsyncpa [#allocation9], 1
    %1135 = vsyncpa [#allocation4], 1

</llo_original>
